<compile_context>
chip_gen: v5e
topology: v5e:2x2
jax: 0.10.0
libtpu: 0.0.40
codegen_flags: <defaults>
</compile_context>

<pallas_src>
import functools

import numpy as np

import jax
import jax.numpy as jnp
from jax.experimental import pallas as pl
from jax.experimental.pallas import tpu as pltpu  # noqa: F401  (TPU backend)


# --------------------------------------------------------------------------
# Host-side (static-shape) construction of the resize+pad matrices
# --------------------------------------------------------------------------
def _interp_matrix_np(in_size: int, out_size: int) -> np.ndarray:
    """(out_size, in_size) bilinear interpolation matrix.

    Matches PyTorch F.interpolate(mode='bilinear', align_corners=False,
    antialias=False). Identity when in_size == out_size.
    """
    if out_size == in_size:
        return np.eye(out_size, dtype=np.float32)
    scale = in_size / out_size
    d = np.arange(out_size, dtype=np.float64)
    real = np.maximum(scale * (d + 0.5) - 0.5, 0.0)
    i0 = np.minimum(np.floor(real).astype(np.int64), in_size - 1)
    i1 = np.minimum(i0 + 1, in_size - 1)
    w1 = (real - i0).astype(np.float32)
    w0 = (1.0 - w1).astype(np.float32)
    m = np.zeros((out_size, in_size), dtype=np.float32)
    rows = np.arange(out_size)
    m[rows, i0] += w0
    m[rows, i1] += w1
    return m


def _target_geometry(H: int, W: int, S: int):
    """Reproduce the module's branch logic (incl. its dimension-swap quirk)."""
    if H >= W and H > S:
        Ht, Wt = int(W * S / H), S
    elif W >= H and W > S:
        Ht, Wt = S, int(H * S / W)
    else:
        Ht, Wt = H, W
    # pad_border == 0 so the first np.pad in the reference is a no-op; only
    # the centering pad matters.
    up = int((S - Ht) / 2)
    left = int((S - Wt) / 2)
    return Ht, Wt, up, left


def _build_weights_np(H: int, W: int, S: int, S_pad: int):
    """f32 (S_pad, H) row-interp and (W, S_pad) col-interp matrices with the
    centered zero padding folded in as zero rows / columns."""
    Ht, Wt, up, left = _target_geometry(H, W, S)
    # TODO(synk): extreme aspect ratios can yield Ht or Wt == 0 (all-zero
    # output here); the torch reference would instead error in resized_crop.
    wy = _interp_matrix_np(H, Ht)                       # (Ht, H)
    wx = _interp_matrix_np(W, Wt)                       # (Wt, W)
    wy_pad = np.zeros((S_pad, H), np.float32)
    wy_pad[up:up + Ht, :] = wy
    wx_pad = np.zeros((W, S_pad), np.float32)
    wx_pad[:, left:left + Wt] = wx.T
    return wy_pad, wx_pad


@functools.lru_cache(maxsize=None)
def _cached_weights(H: int, W: int, S: int, S_pad: int):
    """Device-resident bf16 weights, cached per static (H, W, S)."""
    wy_pad, wx_pad = _build_weights_np(H, W, S, S_pad)
    return (jnp.asarray(wy_pad, dtype=jnp.bfloat16),
            jnp.asarray(wx_pad, dtype=jnp.bfloat16))


# --------------------------------------------------------------------------
# Pallas kernel
# --------------------------------------------------------------------------
def _resize_pad_kernel(x_ref, wx_ref, wy_ref, out_ref, *, num_channels, in_h):
    """out[c] = Wy_pad @ img[c] @ Wx_pad  with channels batched on the MXU.

    x_ref  : (C*H, W)          image, native dtype (channels folded into rows)
    wx_ref : (W, S_pad)   bf16 column interp matrix (zero cols = L/R padding)
    wy_ref : (S_pad, H)   bf16 row interp matrix    (zero rows = T/B padding)
    out_ref: (C, S_pad, S_pad) float32
    """
    # Cast in-kernel (input may be uint8 / f32 / ...); bf16 is MXU-native.
    x = x_ref[...].astype(jnp.float32).astype(jnp.bfloat16)             # (C*H, W)

    # Width contraction: one big MXU matmul with all channels folded in.
    t = jnp.dot(x, wx_ref[...], preferred_element_type=jnp.float32)     # (C*H, S_pad)
    t = t.astype(jnp.bfloat16)

    wy = wy_ref[...]                                                     # (S_pad, H)
    # Height contraction: statically unrolled over the (small) channel count.
    for c in range(num_channels):
        tc = t[c * in_h:(c + 1) * in_h, :]                               # (H, S_pad)
        out_ref[c] = jnp.dot(wy, tc, preferred_element_type=jnp.float32)


# --------------------------------------------------------------------------
# Wrapper
# --------------------------------------------------------------------------
def single_cell_centered(img: jnp.ndarray, cell_image_size: int) -> jnp.ndarray:
    """JAX/Pallas equivalent of Single_cell_centered.forward for a CHW image."""
    C, H, W = img.shape
    S = int(cell_image_size)
    S_pad = ((S + 127) // 128) * 128          # lane-dense (unmasked) stores

    wy_pad, wx_pad = _cached_weights(H, W, S, S_pad)
    x2d = img.reshape(C * H, W)               # contiguous -> free reshape

    kernel = functools.partial(_resize_pad_kernel, num_channels=C, in_h=H)
    out_pad = pl.pallas_call(
        kernel,
        out_shape=jax.ShapeDtypeStruct((C, S_pad, S_pad), jnp.float32),
        # No grid: single invocation, whole arrays live in VMEM. At cell-image
        # sizes the working set is tiny (well under the 32 MiB scoped default
        # on every generation, incl. v7x's smaller VMEM).
        # TODO(synk): for very large inputs, add an H-tiled "arbitrary" grid
        # axis with a VMEM accumulator to bound the working set.
    )(x2d, wx_pad, wy_pad)

    return out_pad[:, :S, :S]


if __name__ == "__main__":
    key = jax.random.PRNGKey(0)
    # Small image consistent with the module: CHW float image in [0, 1).
    C, H, W = 3, 16, 12
    cell_image_size = 8          # module's `size` parameter, small for testing
    img = jax.random.uniform(key, (C, H, W), dtype=jnp.float32)

    out = single_cell_centered(img, cell_image_size)
    out = jax.block_until_ready(out)

    assert out.shape == (C, cell_image_size, cell_image_size), out.shape
    assert out.dtype == jnp.float32

    # f32 reference using the same separable formulation; kernel runs bf16 on
    # the MXU so allow a loose tolerance.
    S_pad = ((cell_image_size + 127) // 128) * 128
    wy_np, wx_np = _build_weights_np(H, W, cell_image_size, S_pad)
    ref = np.einsum(
        "sh,chw,wt->cst",
        wy_np[:cell_image_size, :],
        np.asarray(img, dtype=np.float32),
        wx_np[:, :cell_image_size],
    )
    err = float(np.max(np.abs(np.asarray(out) - ref)))
    assert err < 5e-2, f"max abs err {err}"

    # H=16 >= W=12 and H>8 -> target (6, 8), centered vertically: exactly one
    # zero row of padding at top and bottom, interior nonzero.
    assert float(jnp.abs(out[:, 0, :]).max()) == 0.0
    assert float(jnp.abs(out[:, -1, :]).max()) == 0.0
    assert float(jnp.abs(out[:, 1:-1, :]).max()) > 0.0

    print("KERNEL_OK")
</pallas_src>

<mosaic_0001>
module attributes {stable_mosaic.version = 11 : i64} {
  func.func @_resize_pad_kernel(%arg0: memref<48x12xf32, #tpu.memory_space<vmem>>, %arg1: memref<12x128xbf16, #tpu.memory_space<vmem>>, %arg2: memref<128x16xbf16, #tpu.memory_space<vmem>>, %arg3: memref<3x128x128xf32, #tpu.memory_space<vmem>>) attributes {dimension_semantics = [], scalar_prefetch = 0 : i64, scratch_operands = 0 : i64, tpu.core_type = #tpu.core_type<tc>} {
    %c0 = arith.constant 0 : index
    %c0_0 = arith.constant 0 : index
    %0 = vector.load %arg0[%c0, %c0_0] : memref<48x12xf32, #tpu.memory_space<vmem>>, vector<48x12xf32>
    %1 = arith.truncf %0 : vector<48x12xf32> to vector<48x12xbf16>
    %c0_1 = arith.constant 0 : index
    %c0_2 = arith.constant 0 : index
    %2 = vector.load %arg1[%c0_1, %c0_2] : memref<12x128xbf16, #tpu.memory_space<vmem>>, vector<12x128xbf16>
    %cst = arith.constant dense<0.000000e+00> : vector<48x128xf32>
    %3 = tpu.matmul %1, %2, %cst {dimension_numbers = #tpu.dot_dimension_numbers<[1], [0], [0], [1], [0, 0, 1, 1], [], []>} : vector<48x12xbf16>, vector<12x128xbf16>, vector<48x128xf32> -> vector<48x128xf32>
    %4 = arith.truncf %3 : vector<48x128xf32> to vector<48x128xbf16>
    %c0_3 = arith.constant 0 : index
    %c0_4 = arith.constant 0 : index
    %5 = vector.load %arg2[%c0_3, %c0_4] : memref<128x16xbf16, #tpu.memory_space<vmem>>, vector<128x16xbf16>
    %6 = vector.extract_strided_slice %4 {offsets = [0, 0], sizes = [16, 128], strides = [1, 1]} : vector<48x128xbf16> to vector<16x128xbf16>
    %cst_5 = arith.constant dense<0.000000e+00> : vector<128x128xf32>
    %7 = tpu.matmul %5, %6, %cst_5 {dimension_numbers = #tpu.dot_dimension_numbers<[1], [0], [0], [1], [0, 0, 1, 1], [], []>} : vector<128x16xbf16>, vector<16x128xbf16>, vector<128x128xf32> -> vector<128x128xf32>
    %c0_6 = arith.constant 0 : index
    %c0_7 = arith.constant 0 : index
    %c0_8 = arith.constant 0 : index
    %8 = vector.load %arg3[%c0_6, %c0_7, %c0_8] : memref<3x128x128xf32, #tpu.memory_space<vmem>>, vector<1x128x128xf32>
    %9 = vector.shape_cast %8 : vector<1x128x128xf32> to vector<128x128xf32>
    %10 = vector.shape_cast %7 : vector<128x128xf32> to vector<1x128x128xf32>
    tpu.vector_store %arg3[%c0_6, %c0_7, %c0_8], %10 {strides = array<i32>} : memref<3x128x128xf32, #tpu.memory_space<vmem>>, vector<1x128x128xf32>,
    %11 = vector.extract_strided_slice %4 {offsets = [16, 0], sizes = [16, 128], strides = [1, 1]} : vector<48x128xbf16> to vector<16x128xbf16>
    %cst_9 = arith.constant dense<0.000000e+00> : vector<128x128xf32>
    %12 = tpu.matmul %5, %11, %cst_9 {dimension_numbers = #tpu.dot_dimension_numbers<[1], [0], [0], [1], [0, 0, 1, 1], [], []>} : vector<128x16xbf16>, vector<16x128xbf16>, vector<128x128xf32> -> vector<128x128xf32>
    %c1 = arith.constant 1 : index
    %c0_10 = arith.constant 0 : index
    %c0_11 = arith.constant 0 : index
    %13 = vector.load %arg3[%c1, %c0_10, %c0_11] : memref<3x128x128xf32, #tpu.memory_space<vmem>>, vector<1x128x128xf32>
    %14 = vector.shape_cast %13 : vector<1x128x128xf32> to vector<128x128xf32>
    %15 = vector.shape_cast %12 : vector<128x128xf32> to vector<1x128x128xf32>
    tpu.vector_store %arg3[%c1, %c0_10, %c0_11], %15 {strides = array<i32>} : memref<3x128x128xf32, #tpu.memory_space<vmem>>, vector<1x128x128xf32>,
    %16 = vector.extract_strided_slice %4 {offsets = [32, 0], sizes = [16, 128], strides = [1, 1]} : vector<48x128xbf16> to vector<16x128xbf16>
    %cst_12 = arith.constant dense<0.000000e+00> : vector<128x128xf32>
    %17 = tpu.matmul %5, %16, %cst_12 {dimension_numbers = #tpu.dot_dimension_numbers<[1], [0], [0], [1], [0, 0, 1, 1], [], []>} : vector<128x16xbf16>, vector<16x128xbf16>, vector<128x128xf32> -> vector<128x128xf32>
    %c2 = arith.constant 2 : index
    %c0_13 = arith.constant 0 : index
    %c0_14 = arith.constant 0 : index
    %18 = vector.load %arg3[%c2, %c0_13, %c0_14] : memref<3x128x128xf32, #tpu.memory_space<vmem>>, vector<1x128x128xf32>
    %19 = vector.shape_cast %18 : vector<1x128x128xf32> to vector<128x128xf32>
    %20 = vector.shape_cast %17 : vector<128x128xf32> to vector<1x128x128xf32>
    tpu.vector_store %arg3[%c2, %c0_13, %c0_14], %20 {strides = array<i32>} : memref<3x128x128xf32, #tpu.memory_space<vmem>>, vector<1x128x128xf32>,
    return
  }
}

</mosaic_0001>

<llo_original>
// kernel: tpu_custom_call.1
$region0: #{tpu_custom_call.1}
  #allocation0 [shape = 'u32[]', space=smem, size = 0x4, offset = 0x4, fixed_abs, tag = 'smem constant byte address 0x4 - core index']
  #allocation1 [shape = 'u32[72,128]{1,0:T(1,128)}', space=vmem, size = 0x9000, scoped, tag = 'internal scratch']
  %s0 = inlined_call_operand.vmem [shape: f32[48,12], index: 0, kind: input, shape index: {}]
  %s1 = inlined_call_operand.vmem [shape: bf16[12,128], index: 1, kind: input, shape index: {}]
  %s2 = inlined_call_operand.vmem [shape: bf16[128,16], index: 2, kind: input, shape index: {}]
  %s3 = inlined_call_operand.hbm [shape: f32[3,128,128], index: 3, kind: output, shape index: {}]
  %s4 = sld [smem:[#allocation0]]
  $region22: #{tpu_custom_call.1} parent=0
    _
  %s6 = ssub.s32 1, %s4
  %s7 = scalar_select 0, %s6, %s4
  $region1: #{tpu_custom_call.1} parent=0
    #allocation2 [shape = 'u8[196608]{0}', space=vmem, size = 0x30000, scoped, tag = 'output window, operand 0, single buffered']
    #allocation3 [shape = 's32[1]{0}', space=sflag, size = 0x4, scoped, tag = 'scoped memory for tpu_custom_call.1']
    %8 = vsyncpa [#allocation3], 0
    // Predicated region
    $region2: #{tpu_custom_call.1} parent=1 // pred_check
      _
    $region3: #{tpu_custom_call.1} parent=1 // pred_check_branch
      %10 = sbr.rel (0) target = $region5
    $region4: #{tpu_custom_call.1} parent=1 // pred_region
      _
    $region5: #{tpu_custom_call.1} parent=1 // pred_fallthru
      _
    // Predicated region
    $region6: #{tpu_custom_call.1} parent=1 // pred_check
      _
    $region7: #{tpu_custom_call.1} parent=1 // pred_check_branch
      %12 = sbr.rel (0) target = $region9
    $region8: #{tpu_custom_call.1} parent=1 // pred_region
      _
    $region9: #{tpu_custom_call.1} parent=1 // pred_fallthru
      _
    // Predicated region
    $region10: #{tpu_custom_call.1} parent=1 // pred_check
      _
    $region11: #{tpu_custom_call.1} parent=1 // pred_check_branch
      %14 = sbr.rel (0) target = $region13
    $region12: #{tpu_custom_call.1} parent=1 // pred_region
      _
    $region13: #{tpu_custom_call.1} parent=1 // pred_fallthru
      _
    %v16 = vld [vmem:[%s0] sm:$0xff]
    %v17 = vld [vmem:[%s0 + $0x8] sm:$0xff]
    %v18 = vld [vmem:[%s0 + $0x10] sm:$0xff]
    %v19 = vld [vmem:[%s0 + $0x18] sm:$0xff]
    %v20 = vld [vmem:[%s0 + $0x20] sm:$0xff]
    %v21 = vld [vmem:[%s0 + $0x28] sm:$0xff]
    %v22 = vpack.c.bf16 %v17, %v16
    %v23 = vpack.c.bf16 %v19, %v18
    %v24 = vpack.c.bf16 %v21, %v20
    %v25 = vld [vmem:[%s1] sm:$0xf]
    %v26 = vld [vmem:[%s1 + $0x4] sm:$0x3]
    %v29 = vunpack.c.l.b16 %v25
    %v30 = vunpack.c.l.b16 %v26
    %v31 = vpack.c.b16 %v30, %v29
    %vm32 = vcmask 97280
    %v34 = vsel %vm32, %v22, 0
    %v37 = vsel %vm32, %v23, 0
    %v40 = vsel %vm32, %v24, 0
    %vm42 = vcmask 1045504
    %v44 = vsel %vm42, %v31, 0
    %46 = vmatpush.bf16.msra.mxu0 0
    %47 = vmatpush.bf16.msra.mxu0 0
    %48 = vmatpush.bf16.msra.mxu0 0
    %49 = vmatpush.bf16.msra.mxu0 0
    %50 = vmatpush.bf16.msra.mxu0 0
    %51 = vmatpush.bf16.msra.mxu0 0
    %52 = vmatpush.bf16.msra.mxu0 0
    %53 = vmatpush.bf16.msra.mxu0 %v44
    %54 = vmatmul.bf16.gmra.mxu0 %v34
    %v55 = vpop.f32.mrf.mxu0
    %v56 = vadd.f32 0.0, %v55
    %v57 = vpop.f32.mrf.mxu0
    %v58 = vadd.f32 0.0, %v57
    %59 = vmatmul.bf16.gmra.mxu0 %v37
    %v60 = vpop.f32.mrf.mxu0
    %v61 = vadd.f32 0.0, %v60
    %v62 = vpop.f32.mrf.mxu0
    %v63 = vadd.f32 0.0, %v62
    %64 = vmatmul.bf16.gmra.mxu0 %v40
    %v65 = vpop.f32.mrf.mxu0
    %v66 = vadd.f32 0.0, %v65
    %v67 = vpop.f32.mrf.mxu0
    %v68 = vadd.f32 0.0, %v67
    %69 = vdwg.mxu0
    %v70 = vpack.c.bf16 %v56, %v56
    %v71 = vpack.c.bf16 %v58, %v58
    %v72 = vpack.c.bf16 %v61, %v61
    %v73 = vpack.c.bf16 %v63, %v63
    %v74 = vpack.c.bf16 %v66, %v66
    %v75 = vpack.c.bf16 %v68, %v68
    %v76 = vld [vmem:[%s2] sm:$0xf]
    %v77 = vld [vmem:[%s2 + $0x4] sm:$0xf]
    %v78 = vld [vmem:[%s2 + $0x8] sm:$0xf]
    %v79 = vld [vmem:[%s2 + $0xc] sm:$0xf]
    %v80 = vld [vmem:[%s2 + $0x10] sm:$0xf]
    %v81 = vld [vmem:[%s2 + $0x14] sm:$0xf]
    %v82 = vld [vmem:[%s2 + $0x18] sm:$0xf]
    %v83 = vld [vmem:[%s2 + $0x1c] sm:$0xf]
    %v84 = vld [vmem:[%s2 + $0x20] sm:$0xf]
    %v85 = vld [vmem:[%s2 + $0x24] sm:$0xf]
    %v86 = vld [vmem:[%s2 + $0x28] sm:$0xf]
    %v87 = vld [vmem:[%s2 + $0x2c] sm:$0xf]
    %v88 = vld [vmem:[%s2 + $0x30] sm:$0xf]
    %v89 = vld [vmem:[%s2 + $0x34] sm:$0xf]
    %v90 = vld [vmem:[%s2 + $0x38] sm:$0xf]
    %v91 = vld [vmem:[%s2 + $0x3c] sm:$0xf]
    %v108 = vunpack.c.l.b16 %v76
    %v109 = vunpack.c.l.b16 %v77
    %v110 = vunpack.c.l.b16 %v78
    %v111 = vunpack.c.l.b16 %v79
    %v112 = vunpack.c.l.b16 %v80
    %v113 = vunpack.c.l.b16 %v81
    %v114 = vunpack.c.l.b16 %v82
    %v115 = vunpack.c.l.b16 %v83
    %v116 = vunpack.c.l.b16 %v84
    %v117 = vunpack.c.l.b16 %v85
    %v118 = vunpack.c.l.b16 %v86
    %v119 = vunpack.c.l.b16 %v87
    %v120 = vunpack.c.l.b16 %v88
    %v121 = vunpack.c.l.b16 %v89
    %v122 = vunpack.c.l.b16 %v90
    %v123 = vunpack.c.l.b16 %v91
    %v124 = vpack.c.b16 %v109, %v108
    %v125 = vpack.c.b16 %v111, %v110
    %v126 = vpack.c.b16 %v113, %v112
    %v127 = vpack.c.b16 %v115, %v114
    %v128 = vpack.c.b16 %v117, %v116
    %v129 = vpack.c.b16 %v119, %v118
    %v130 = vpack.c.b16 %v121, %v120
    %v131 = vpack.c.b16 %v123, %v122
    %v134 = vunpack.c.l.b16 %v70
    %v135 = vunpack.c.l.b16 %v71
    %v136 = vpack.c.b16 %v135, %v134
    %vm138 = vcmask 130048
    %v140 = vsel %vm138, %v124, 0
    %v143 = vsel %vm138, %v125, 0
    %v146 = vsel %vm138, %v126, 0
    %v149 = vsel %vm138, %v127, 0
    %v152 = vsel %vm138, %v128, 0
    %v155 = vsel %vm138, %v129, 0
    %v158 = vsel %vm138, %v130, 0
    %v161 = vsel %vm138, %v131, 0
    %163 = vmatpush.bf16.msra.mxu0 0
    %164 = vmatpush.bf16.msra.mxu0 0
    %165 = vmatpush.bf16.msra.mxu0 0
    %166 = vmatpush.bf16.msra.mxu0 0
    %167 = vmatpush.bf16.msra.mxu0 0
    %168 = vmatpush.bf16.msra.mxu0 0
    %169 = vmatpush.bf16.msra.mxu0 0
    %170 = vmatpush.bf16.msra.mxu0 %v136
    %171 = vmatmul.bf16.gmra.mxu0 %v140
    %v172 = vpop.f32.mrf.mxu0
    %v173 = vadd.f32 0.0, %v172
    %v174 = vpop.f32.mrf.mxu0
    %v175 = vadd.f32 0.0, %v174
    %176 = vmatmul.bf16.gmra.mxu0 %v143
    %v177 = vpop.f32.mrf.mxu0
    %v178 = vadd.f32 0.0, %v177
    %v179 = vpop.f32.mrf.mxu0
    %v180 = vadd.f32 0.0, %v179
    %181 = vmatmul.bf16.gmra.mxu0 %v146
    %v182 = vpop.f32.mrf.mxu0
    %v183 = vadd.f32 0.0, %v182
    %v184 = vpop.f32.mrf.mxu0
    %v185 = vadd.f32 0.0, %v184
    %186 = vmatmul.bf16.gmra.mxu0 %v149
    %v187 = vpop.f32.mrf.mxu0
    %v188 = vadd.f32 0.0, %v187
    %v189 = vpop.f32.mrf.mxu0
    %v190 = vadd.f32 0.0, %v189
    %191 = vmatmul.bf16.gmra.mxu0 %v152
    %v192 = vpop.f32.mrf.mxu0
    %v193 = vadd.f32 0.0, %v192
    %v194 = vpop.f32.mrf.mxu0
    %v195 = vadd.f32 0.0, %v194
    %196 = vmatmul.bf16.gmra.mxu0 %v155
    %v197 = vpop.f32.mrf.mxu0
    %v198 = vadd.f32 0.0, %v197
    %v199 = vpop.f32.mrf.mxu0
    %v200 = vadd.f32 0.0, %v199
    %201 = vmatmul.bf16.gmra.mxu0 %v158
    %v202 = vpop.f32.mrf.mxu0
    %v203 = vadd.f32 0.0, %v202
    %v204 = vpop.f32.mrf.mxu0
    %v205 = vadd.f32 0.0, %v204
    %206 = vmatmul.bf16.gmra.mxu0 %v161
    %v207 = vpop.f32.mrf.mxu0
    %v208 = vadd.f32 0.0, %v207
    %v209 = vpop.f32.mrf.mxu0
    %v210 = vadd.f32 0.0, %v209
    %211 = vdwg.mxu0
    %212 = vst [vmem:[#allocation2] sm:$0xff] %v173
    %213 = vst [vmem:[#allocation2 + $0x8] sm:$0xff] %v175
    %214 = vst [vmem:[#allocation2 + $0x10] sm:$0xff] %v178
    %215 = vst [vmem:[#allocation2 + $0x18] sm:$0xff] %v180
    %216 = vst [vmem:[#allocation2 + $0x20] sm:$0xff] %v183
    %217 = vst [vmem:[#allocation2 + $0x28] sm:$0xff] %v185
    %218 = vst [vmem:[#allocation2 + $0x30] sm:$0xff] %v188
    %219 = vst [vmem:[#allocation2 + $0x38] sm:$0xff] %v190
    %220 = vst [vmem:[#allocation2 + $0x40] sm:$0xff] %v193
    %221 = vst [vmem:[#allocation2 + $0x48] sm:$0xff] %v195
    %222 = vst [vmem:[#allocation2 + $0x50] sm:$0xff] %v198
    %223 = vst [vmem:[#allocation2 + $0x58] sm:$0xff] %v200
    %224 = vst [vmem:[#allocation2 + $0x60] sm:$0xff] %v203
    %225 = vst [vmem:[#allocation2 + $0x68] sm:$0xff] %v205
    %226 = vst [vmem:[#allocation2 + $0x70] sm:$0xff] %v208
    %227 = vst [vmem:[#allocation2 + $0x78] sm:$0xff] %v210
    %v230 = vunpack.c.l.b16 %v72
    %v231 = vunpack.c.l.b16 %v73
    %v232 = vpack.c.b16 %v231, %v230
    %234 = vmatpush.bf16.msra.mxu0 0
    %235 = vmatpush.bf16.msra.mxu0 0
    %236 = vmatpush.bf16.msra.mxu0 0
    %237 = vmatpush.bf16.msra.mxu0 0
    %238 = vmatpush.bf16.msra.mxu0 0
    %239 = vmatpush.bf16.msra.mxu0 0
    %240 = vmatpush.bf16.msra.mxu0 0
    %241 = vmatpush.bf16.msra.mxu0 %v232
    %242 = vmatmul.bf16.gmra.mxu0 %v140
    %v243 = vpop.f32.mrf.mxu0
    %v244 = vadd.f32 0.0, %v243
    %v245 = vpop.f32.mrf.mxu0
    %v246 = vadd.f32 0.0, %v245
    %247 = vmatmul.bf16.gmra.mxu0 %v143
    %v248 = vpop.f32.mrf.mxu0
    %v249 = vadd.f32 0.0, %v248
    %v250 = vpop.f32.mrf.mxu0
    %v251 = vadd.f32 0.0, %v250
    %252 = vmatmul.bf16.gmra.mxu0 %v146
    %v253 = vpop.f32.mrf.mxu0
    %v254 = vadd.f32 0.0, %v253
    %v255 = vpop.f32.mrf.mxu0
    %v256 = vadd.f32 0.0, %v255
    %257 = vmatmul.bf16.gmra.mxu0 %v149
    %v258 = vpop.f32.mrf.mxu0
    %v259 = vadd.f32 0.0, %v258
    %v260 = vpop.f32.mrf.mxu0
    %v261 = vadd.f32 0.0, %v260
    %262 = vmatmul.bf16.gmra.mxu0 %v152
    %v263 = vpop.f32.mrf.mxu0
    %v264 = vadd.f32 0.0, %v263
    %v265 = vpop.f32.mrf.mxu0
    %v266 = vadd.f32 0.0, %v265
    %267 = vmatmul.bf16.gmra.mxu0 %v155
    %v268 = vpop.f32.mrf.mxu0
    %v269 = vadd.f32 0.0, %v268
    %v270 = vpop.f32.mrf.mxu0
    %v271 = vadd.f32 0.0, %v270
    %272 = vmatmul.bf16.gmra.mxu0 %v158
    %v273 = vpop.f32.mrf.mxu0
    %v274 = vadd.f32 0.0, %v273
    %v275 = vpop.f32.mrf.mxu0
    %v276 = vadd.f32 0.0, %v275
    %277 = vmatmul.bf16.gmra.mxu0 %v161
    %v278 = vpop.f32.mrf.mxu0
    %v279 = vadd.f32 0.0, %v278
    %v280 = vpop.f32.mrf.mxu0
    %v281 = vadd.f32 0.0, %v280
    %282 = vdwg.mxu0
    %s283 = scalar_lea.vmem [#allocation2], 128
    %284 = vst [vmem:[%s283] sm:$0xff] %v244
    %285 = vst [vmem:[%s283 + $0x8] sm:$0xff] %v246
    %286 = vst [vmem:[%s283 + $0x10] sm:$0xff] %v249
    %287 = vst [vmem:[%s283 + $0x18] sm:$0xff] %v251
    %288 = vst [vmem:[%s283 + $0x20] sm:$0xff] %v254
    %289 = vst [vmem:[%s283 + $0x28] sm:$0xff] %v256
    %290 = vst [vmem:[%s283 + $0x30] sm:$0xff] %v259
    %291 = vst [vmem:[%s283 + $0x38] sm:$0xff] %v261
    %292 = vst [vmem:[%s283 + $0x40] sm:$0xff] %v264
    %293 = vst [vmem:[%s283 + $0x48] sm:$0xff] %v266
    %294 = vst [vmem:[%s283 + $0x50] sm:$0xff] %v269
    %295 = vst [vmem:[%s283 + $0x58] sm:$0xff] %v271
    %296 = vst [vmem:[%s283 + $0x60] sm:$0xff] %v274
    %297 = vst [vmem:[%s283 + $0x68] sm:$0xff] %v276
    %298 = vst [vmem:[%s283 + $0x70] sm:$0xff] %v279
    %299 = vst [vmem:[%s283 + $0x78] sm:$0xff] %v281
    %v302 = vunpack.c.l.b16 %v74
    %v303 = vunpack.c.l.b16 %v75
    %v304 = vpack.c.b16 %v303, %v302
    %306 = vmatpush.bf16.msra.mxu0 0
    %307 = vmatpush.bf16.msra.mxu0 0
    %308 = vmatpush.bf16.msra.mxu0 0
    %309 = vmatpush.bf16.msra.mxu0 0
    %310 = vmatpush.bf16.msra.mxu0 0
    %311 = vmatpush.bf16.msra.mxu0 0
    %312 = vmatpush.bf16.msra.mxu0 0
    %313 = vmatpush.bf16.msra.mxu0 %v304
    %314 = vmatmul.bf16.gmra.mxu0 %v140
    %v315 = vpop.f32.mrf.mxu0
    %v316 = vadd.f32 0.0, %v315
    %v317 = vpop.f32.mrf.mxu0
    %v318 = vadd.f32 0.0, %v317
    %319 = vmatmul.bf16.gmra.mxu0 %v143
    %v320 = vpop.f32.mrf.mxu0
    %v321 = vadd.f32 0.0, %v320
    %v322 = vpop.f32.mrf.mxu0
    %v323 = vadd.f32 0.0, %v322
    %324 = vmatmul.bf16.gmra.mxu0 %v146
    %v325 = vpop.f32.mrf.mxu0
    %v326 = vadd.f32 0.0, %v325
    %v327 = vpop.f32.mrf.mxu0
    %v328 = vadd.f32 0.0, %v327
    %329 = vmatmul.bf16.gmra.mxu0 %v149
    %v330 = vpop.f32.mrf.mxu0
    %v331 = vadd.f32 0.0, %v330
    %v332 = vpop.f32.mrf.mxu0
    %v333 = vadd.f32 0.0, %v332
    %334 = vmatmul.bf16.gmra.mxu0 %v152
    %v335 = vpop.f32.mrf.mxu0
    %v336 = vadd.f32 0.0, %v335
    %v337 = vpop.f32.mrf.mxu0
    %v338 = vadd.f32 0.0, %v337
    %339 = vmatmul.bf16.gmra.mxu0 %v155
    %v340 = vpop.f32.mrf.mxu0
    %v341 = vadd.f32 0.0, %v340
    %v342 = vpop.f32.mrf.mxu0
    %v343 = vadd.f32 0.0, %v342
    %344 = vmatmul.bf16.gmra.mxu0 %v158
    %v345 = vpop.f32.mrf.mxu0
    %v346 = vadd.f32 0.0, %v345
    %v347 = vpop.f32.mrf.mxu0
    %v348 = vadd.f32 0.0, %v347
    %349 = vmatmul.bf16.gmra.mxu0 %v161
    %v350 = vpop.f32.mrf.mxu0
    %v351 = vadd.f32 0.0, %v350
    %v352 = vpop.f32.mrf.mxu0
    %v353 = vadd.f32 0.0, %v352
    %354 = vdwg.mxu0
    %s355 = scalar_lea.vmem [#allocation2], 256
    %356 = vst [vmem:[%s355] sm:$0xff] %v316
    %357 = vst [vmem:[%s355 + $0x8] sm:$0xff] %v318
    %358 = vst [vmem:[%s355 + $0x10] sm:$0xff] %v321
    %359 = vst [vmem:[%s355 + $0x18] sm:$0xff] %v323
    %360 = vst [vmem:[%s355 + $0x20] sm:$0xff] %v326
    %361 = vst [vmem:[%s355 + $0x28] sm:$0xff] %v328
    %362 = vst [vmem:[%s355 + $0x30] sm:$0xff] %v331
    %363 = vst [vmem:[%s355 + $0x38] sm:$0xff] %v333
    %364 = vst [vmem:[%s355 + $0x40] sm:$0xff] %v336
    %365 = vst [vmem:[%s355 + $0x48] sm:$0xff] %v338
    %366 = vst [vmem:[%s355 + $0x50] sm:$0xff] %v341
    %367 = vst [vmem:[%s355 + $0x58] sm:$0xff] %v343
    %368 = vst [vmem:[%s355 + $0x60] sm:$0xff] %v346
    %369 = vst [vmem:[%s355 + $0x68] sm:$0xff] %v348
    %370 = vst [vmem:[%s355 + $0x70] sm:$0xff] %v351
    %371 = vst [vmem:[%s355 + $0x78] sm:$0xff] %v353
    // Predicated region
    $region14: #{tpu_custom_call.1} parent=1 // pred_check
      _
    $region15: #{tpu_custom_call.1} parent=1 // pred_check_branch
      %373 = sbr.rel (0) target = $region17
    $region16: #{tpu_custom_call.1} parent=1 // pred_region
      %375 = vsyncadd [#allocation3], 0
      %s376 = sshll.u32 [#allocation2], 4
      %s377 = int_to_ptr.vmem [resolvable:$true] %s376
      %s378 = sshll.u32 %s3, 4
      %s379 = int_to_ptr.hbm [resolvable:$true] %s378
      %384 = dma.vmem_to_hbm [thread:$0]  %s377, 6144, %s379, [#allocation3], 128, 128, 8
    $region17: #{tpu_custom_call.1} parent=1 // pred_fallthru
      _
    // Predicated region
    $region18: #{tpu_custom_call.1} parent=1 // pred_check
      _
    $region19: #{tpu_custom_call.1} parent=1 // pred_check_branch
      %386 = sbr.rel (0) target = $region21
    $region20: #{tpu_custom_call.1} parent=1 // pred_region
      %388 = dma.done [#allocation3], 6144
    $region21: #{tpu_custom_call.1} parent=1 // pred_fallthru
      _
    %389 = vsyncpa [#allocation3], 1

</llo_original>
